<compile_context>
chip_gen: v5e
topology: v5e:2x2
jax: 0.10.0
libtpu: 0.0.40
codegen_flags: <defaults>
</compile_context>

<pallas_src>
import jax
import jax.numpy as jnp
from jax.experimental import pallas as pl
from jax.experimental.pallas import tpu as pltpu

_SMALL_BYTES = 1 << 20          # <= 1 MiB total: single-block copy, no grid
_TARGET_BLOCK_BYTES = 2 << 20   # ~2 MiB per block (v5e 16 MiB scoped VMEM safe)
_MAX_LANES = 8192               # lane-width cap for the flat 2D view


def _copy_kernel(x_ref, o_ref):
    """Lane-dense tile copy: o <- x."""
    o_ref[...] = x_ref[...]


def _single_block_copy_2d(x2d: jax.Array) -> jax.Array:
    """Whole-array copy in one block (tiny inputs; no pipeline overhead)."""
    return pl.pallas_call(
        _copy_kernel,
        out_shape=jax.ShapeDtypeStruct(x2d.shape, x2d.dtype),
    )(x2d)


def _tiled_copy_rows(x2d: jax.Array, tile_m: int) -> jax.Array:
    """Row-tiled copy of a sublane/lane-dense (rows, lanes) slab."""
    M, N = x2d.shape
    return pl.pallas_call(
        _copy_kernel,
        grid=(pl.cdiv(M, tile_m),),
        in_specs=[pl.BlockSpec((tile_m, N), lambda i: (i, 0))],
        out_specs=pl.BlockSpec((tile_m, N), lambda i: (i, 0)),
        out_shape=jax.ShapeDtypeStruct((M, N), x2d.dtype),
        compiler_params=pltpu.CompilerParams(
            dimension_semantics=("parallel",),
        ),
    )(x2d)


def _tiled_copy_2d(x2d: jax.Array, tile_m: int, tile_n: int) -> jax.Array:
    """General 2D tiled copy (fallback for awkward, non-128-divisible sizes)."""
    M, N = x2d.shape
    return pl.pallas_call(
        _copy_kernel,
        grid=(pl.cdiv(M, tile_m), pl.cdiv(N, tile_n)),
        in_specs=[pl.BlockSpec((tile_m, tile_n), lambda i, j: (i, j))],
        out_specs=pl.BlockSpec((tile_m, tile_n), lambda i, j: (i, j)),
        out_shape=jax.ShapeDtypeStruct((M, N), x2d.dtype),
        compiler_params=pltpu.CompilerParams(
            dimension_semantics=("parallel", "parallel"),
        ),
    )(x2d)


def _materialize_codes(x: jax.Array) -> jax.Array:
    """Copy x into a fresh buffer (same shape/dtype) using a Pallas kernel."""
    dt_bytes = jnp.dtype(x.dtype).itemsize
    total = x.size
    total_bytes = total * dt_bytes
    lead = 1
    for d in x.shape[:-1]:
        lead *= d
    last = x.shape[-1]

    # Tiny inputs: one block, no grid, no masked partial stores to worry about.
    if total_bytes <= _SMALL_BYTES:
        out2d = _single_block_copy_2d(x.reshape(lead, last))
        return out2d.reshape(x.shape)

    if total % 128 == 0:
        # Sublane+lane dense flat view.  The copy preserves contiguous element
        # order, so any exact factorization of the flat size is valid, even
        # when B*C < 8 (avoids wasted sublanes / masked vst on small M).
        k_max = min(total // 128, _MAX_LANES // 128)
        lanes = 128
        for k in range(k_max, 0, -1):
            if total % (128 * k) == 0:
                lanes = 128 * k
                break
        rows = total // lanes
        # Byte-budget tile height (multiple of 8, ~2 MiB per block).
        budget_rows = max(8, (_TARGET_BLOCK_BYTES // (lanes * dt_bytes)) // 8 * 8)
        tile_m = rows if rows <= budget_rows else budget_rows
        out2d = _tiled_copy_rows(x.reshape(rows, lanes), tile_m)
        return out2d.reshape(x.shape)

    # Fallback: (lead, T) view; edge blocks are padded by Pallas.
    tile_m = lead if lead <= 256 else 256        # multiple of 8 or full dim
    tile_n = last if last <= 2048 else 2048      # multiple of 128 or full dim
    out2d = _tiled_copy_2d(x.reshape(lead, last), tile_m, tile_n)
    return out2d.reshape(x.shape)


def dummy_quantizer_forward(x: jax.Array, frame_rate: int, *,
                            materialize_codes: bool = False):
    """Pallas/JAX implementation of DummyQuantizer.forward.

    Args:
      x: [B, C, T] array (batch, channels, time).
      frame_rate: python int.
      materialize_codes: if False (default), `codes` is a free reshape of x
        (matching PyTorch's view semantics of `unsqueeze(1)`).  If True,
        `codes` is materialized into a distinct buffer with a Pallas copy
        kernel.

    Returns:
      (x_out, codes, bandwidth):
        x_out:     [B, C, T]     == x (identity)
        codes:     [B, 1, C, T]  == x[:, None]
        bandwidth: scalar, dtype == x.dtype
    """
    B = x.shape[0]
    # Bandwidth is pure static shape arithmetic (codes.numel() == x.size).
    bandwidth = jnp.asarray(x.size * 32 * frame_rate / 1000 / B, dtype=x.dtype)

    if materialize_codes:
        codes = _materialize_codes(x).reshape((B, 1) + x.shape[1:])
    else:
        # PyTorch `x.unsqueeze(1)` is a view; a reshape is free (no HBM traffic).
        codes = x.reshape((B, 1) + x.shape[1:])

    # Identity pass-through: no kernel, no extra HBM traffic.
    return x, codes, bandwidth


if __name__ == "__main__":
    frame_rate = 50

    # Small shape consistent with the module (B, C, T).
    B, C, T = 2, 4, 16
    x = jax.random.normal(jax.random.PRNGKey(0), (B, C, T), dtype=jnp.float32)

    # Default path: view semantics (free reshape), matches PyTorch unsqueeze(1).
    x_out, codes_view, bw = dummy_quantizer_forward(x, frame_rate)
    # Pallas path: explicit materialized codes (single-block kernel at this size).
    _, codes_pallas, _ = dummy_quantizer_forward(x, frame_rate, materialize_codes=True)
    jax.block_until_ready((x_out, codes_view, codes_pallas, bw))

    ref_codes = x[:, None, :, :]
    ref_bw = jnp.asarray(ref_codes.size * 32 * frame_rate / 1000 / B, dtype=x.dtype)

    assert x_out.shape == (B, C, T) and x_out.dtype == x.dtype
    assert jnp.array_equal(x_out, x)
    assert codes_view.shape == (B, 1, C, T) and jnp.array_equal(codes_view, ref_codes)
    assert codes_pallas.shape == (B, 1, C, T) and codes_pallas.dtype == x.dtype
    assert jnp.array_equal(codes_pallas, ref_codes)
    assert bw.shape == () and bw.dtype == x.dtype and jnp.allclose(bw, ref_bw)

    # Larger input to exercise the byte-budget tiled copy path
    # (flat view -> (128, 8192), tile_m = 64, grid = (2,), ~2 MiB blocks).
    B2, C2, T2 = 2, 4, 131072
    x2 = jax.random.normal(jax.random.PRNGKey(1), (B2, C2, T2), dtype=jnp.float32)
    _, codes2, bw2 = dummy_quantizer_forward(x2, frame_rate, materialize_codes=True)
    jax.block_until_ready((codes2, bw2))
    assert codes2.shape == (B2, 1, C2, T2)
    assert jnp.array_equal(codes2, x2[:, None])
    assert jnp.allclose(
        bw2, jnp.asarray(x2.size * 32 * frame_rate / 1000 / B2, dtype=x2.dtype))

    print("KERNEL_OK")
</pallas_src>

<mosaic_0001>
module attributes {stable_mosaic.version = 11 : i64} {
  func.func @_copy_kernel(%arg0: memref<8x16xf32, #tpu.memory_space<vmem>>, %arg1: memref<8x16xf32, #tpu.memory_space<vmem>>) attributes {dimension_semantics = [], scalar_prefetch = 0 : i64, scratch_operands = 0 : i64, tpu.core_type = #tpu.core_type<tc>} {
    %c0 = arith.constant 0 : index
    %c0_0 = arith.constant 0 : index
    %0 = vector.load %arg0[%c0, %c0_0] : memref<8x16xf32, #tpu.memory_space<vmem>>, vector<8x16xf32>
    %c0_1 = arith.constant 0 : index
    %c0_2 = arith.constant 0 : index
    %1 = vector.load %arg1[%c0_1, %c0_2] : memref<8x16xf32, #tpu.memory_space<vmem>>, vector<8x16xf32>
    tpu.vector_store %arg1[%c0_1, %c0_2], %0 {strides = array<i32>} : memref<8x16xf32, #tpu.memory_space<vmem>>, vector<8x16xf32>,
    return
  }
}

</mosaic_0001>

<llo_original>
// kernel: tpu_custom_call.1
$region0: #{tpu_custom_call.1}
  #allocation0 [shape = 'u32[]', space=smem, size = 0x4, offset = 0x4, fixed_abs, tag = 'smem constant byte address 0x4 - core index']
  #allocation1 [shape = 'u32[72,128]{1,0:T(1,128)}', space=vmem, size = 0x9000, scoped, tag = 'internal scratch']
  %s0 = inlined_call_operand.hbm [shape: f32[8,16], index: 0, kind: input, shape index: {}]
  %s1 = inlined_call_operand.hbm [shape: f32[8,16], index: 1, kind: output, shape index: {}]
  %s2 = sld [smem:[#allocation0]]
  $region18: #{tpu_custom_call.1} parent=0
    _
  %s4 = ssub.s32 1, %s2
  %s5 = scalar_select 0, %s4, %s2
  $region1: #{tpu_custom_call.1} parent=0
    #allocation2 [shape = 'u8[4096]{0}', space=vmem, size = 0x1000, scoped, tag = 'input window, operand 0, single buffered']
    #allocation3 [shape = 's32[1]{0}', space=sflag, size = 0x4, scoped, tag = 'scoped memory for tpu_custom_call.1']
    #allocation4 [shape = 's32[1]{0}', space=sflag, size = 0x4, scoped, tag = 'scoped memory for tpu_custom_call.1']
    #allocation5 [shape = 'u8[4096]{0}', space=vmem, size = 0x1000, scoped, tag = 'output window, operand 0, single buffered']
    %6 = vsyncpa [#allocation3], 0
    %7 = vsyncpa [#allocation4], 0
    // Predicated region
    $region2: #{tpu_custom_call.1} parent=1 // pred_check
      _
    $region3: #{tpu_custom_call.1} parent=1 // pred_check_branch
      %9 = sbr.rel (0) target = $region5
    $region4: #{tpu_custom_call.1} parent=1 // pred_region
      %11 = vsyncadd [#allocation3], 0
      %s13 = sshll.u32 %s0, 4
      %s14 = int_to_ptr.hbm [resolvable:$true] %s13
      %s15 = sshll.u32 [#allocation2], 4
      %s16 = int_to_ptr.vmem [resolvable:$true] %s15
      %18 = dma.hbm_to_vmem [thread:$0]  %s14, 128, %s16, [#allocation3]
    $region5: #{tpu_custom_call.1} parent=1 // pred_fallthru
      _
    // Predicated region
    $region6: #{tpu_custom_call.1} parent=1 // pred_check
      _
    $region7: #{tpu_custom_call.1} parent=1 // pred_check_branch
      %20 = sbr.rel (0) target = $region9
    $region8: #{tpu_custom_call.1} parent=1 // pred_region
      %22 = dma.done [#allocation3], 128
    $region9: #{tpu_custom_call.1} parent=1 // pred_fallthru
      _
    %v23 = vld [vmem:[#allocation2] sm:$0xff]
    %vm24 = vcmask 130048
    %25 = vst.msk [vmem:[#allocation5] sm:$0xff] %vm24, %v23
    // Predicated region
    $region10: #{tpu_custom_call.1} parent=1 // pred_check
      _
    $region11: #{tpu_custom_call.1} parent=1 // pred_check_branch
      %27 = sbr.rel (0) target = $region13
    $region12: #{tpu_custom_call.1} parent=1 // pred_region
      %29 = vsyncadd [#allocation4], 0
      %s31 = sshll.u32 [#allocation5], 4
      %s32 = int_to_ptr.vmem [resolvable:$true] %s31
      %s33 = sshll.u32 %s1, 4
      %s34 = int_to_ptr.hbm [resolvable:$true] %s33
      %36 = dma.vmem_to_hbm [thread:$0]  %s32, 128, %s34, [#allocation4]
    $region13: #{tpu_custom_call.1} parent=1 // pred_fallthru
      _
    // Predicated region
    $region14: #{tpu_custom_call.1} parent=1 // pred_check
      _
    $region15: #{tpu_custom_call.1} parent=1 // pred_check_branch
      %38 = sbr.rel (0) target = $region17
    $region16: #{tpu_custom_call.1} parent=1 // pred_region
      %40 = dma.done [#allocation4], 128
    $region17: #{tpu_custom_call.1} parent=1 // pred_fallthru
      _
    %41 = vsyncpa [#allocation3], 1
    %42 = vsyncpa [#allocation4], 1

</llo_original>
